<compile_context>
chip_gen: v5e
topology: v5e:2x2
jax: 0.10.0
libtpu: 0.0.40
codegen_flags: <defaults>
</compile_context>

<pallas_src>
import functools

import jax
import jax.numpy as jnp
from jax import lax
from jax.experimental import pallas as pl
from jax.experimental.pallas import tpu as pltpu

EPS = 1e-6
_LANE = 128


def _round_up(x, m):
    return (x + m - 1) // m * m


def _vmem_capacity_bytes():
    try:
        return int(pltpu.get_tpu_info().vmem_capacity_bytes)
    except Exception:
        return 64 * 1024 * 1024  # conservative fallback (v7x per-TC VMEM)


def prepare_sublayer_params(a_2, b_2, w, wb, *, mxu_dtype=None):
    """Pad / cast the parameters ONCE (call at init, not per forward pass)."""
    D = int(a_2.shape[0])
    D_pad = D if D % _LANE == 0 else _round_up(max(D, _LANE), _LANE)
    w_dtype = jnp.dtype(mxu_dtype) if mxu_dtype is not None else jnp.dtype(w.dtype)
    if D_pad == D:
        a2 = a_2.reshape(1, D)
        b2 = b_2.reshape(1, D)
        w2 = w.astype(w_dtype)
        wb2 = wb.reshape(1, D)
    else:
        a2 = jnp.zeros((1, D_pad), a_2.dtype).at[0, :D].set(a_2)
        b2 = jnp.zeros((1, D_pad), b_2.dtype).at[0, :D].set(b_2)
        w2 = jnp.zeros((D_pad, D_pad), w_dtype).at[:D, :D].set(w.astype(w_dtype))
        wb2 = jnp.zeros((1, D_pad), wb.dtype).at[0, :D].set(wb)
    return dict(a2=a2, b2=b2, w2=w2, wb2=wb2, d_valid=D, d_pad=D_pad)


def _sublayer_kernel(x_ref, a_ref, b_ref, w_ref, wb_ref, o_ref,
                     normed_ref, acc_ref, *, d_valid, tile_k, approx_reciprocal):
    # x_ref/o_ref: (TILE_N, D_pad)   a/b/wb: (1, D_pad)   w_ref: (TILE_K, D_pad)
    # normed_ref: (TILE_N, D_pad) in MXU feed dtype   acc_ref: (TILE_N, D_pad) f32
    k = pl.program_id(1)

    @pl.when(k == 0)
    def _():
        # LayerNorm once per row tile; cached in VMEM across the K sweep.
        x = x_ref[...].astype(jnp.float32)
        d_pad = x.shape[-1]
        if d_pad == d_valid:
            mean = jnp.mean(x, axis=-1, keepdims=True)
            xc = x - mean
        else:
            # Padded feature lanes hold zeros; exclude them from the statistics.
            lane = lax.broadcasted_iota(jnp.int32, (1, d_pad), 1)
            mask = lane < d_valid
            mean = jnp.sum(x, axis=-1, keepdims=True) * (1.0 / d_valid)
            xc = jnp.where(mask, x - mean, 0.0)
        # PyTorch x.std(-1): unbiased variance, eps added OUTSIDE the sqrt.
        denom = max(d_valid - 1, 1)
        var = jnp.sum(xc * xc, axis=-1, keepdims=True) * (1.0 / denom)
        std = jnp.sqrt(var) + EPS
        # NOTE: all-zero padded rows give inv_std ~ 1/eps; harmless (xc == 0 there
        # and padded rows are sliced off) -- do not reorder past the mask above.
        if approx_reciprocal:
            inv_std = pl.reciprocal(std, approx=True)   # EUP slot
        else:
            inv_std = 1.0 / std                          # exact (PyTorch-faithful)
        normed = (a_ref[...].astype(jnp.float32) * (xc * inv_std)
                  + b_ref[...].astype(jnp.float32))
        normed_ref[...] = normed.astype(normed_ref.dtype)
        acc_ref[...] = jnp.zeros_like(acc_ref)

    # K-streamed matmul: acc += normed[:, k*TK:(k+1)*TK] @ W[k*TK:(k+1)*TK, :]
    k_start = pl.multiple_of(k * tile_k, tile_k)
    acc_ref[...] += jnp.dot(normed_ref[:, pl.ds(k_start, tile_k)], w_ref[...],
                            preferred_element_type=jnp.float32)

    @pl.when(k == pl.num_programs(1) - 1)
    def _():
        sub = acc_ref[...] + wb_ref[...].astype(jnp.float32)
        # dropout (eval mode == identity) + residual; re-read x from the
        # VMEM-resident input ref so no f32 temp stays live across the MXU phase.
        # TODO(synk): training-mode stochastic dropout (pltpu.prng_*) not implemented.
        o_ref[...] = (x_ref[...].astype(jnp.float32) + sub).astype(o_ref.dtype)


def _choose_tiles(N, D_pad, x_itemsize, w_itemsize):
    # Packed-sublane multiple: 8 (f32), 16 (bf16), 32 (int8/fp8); honor the
    # stricter of the input dtype and the MXU-feed (scratch) dtype.
    sub_mult = max(8, 32 // x_itemsize, 32 // w_itemsize)

    # K tile for streaming the weight: largest 128-multiple divisor of D_pad <= 512.
    if D_pad <= 512:
        tile_k = D_pad
    else:
        tile_k = 128
        for cand in (512, 384, 256, 128):
            if D_pad % cand == 0:
                tile_k = cand
                break

    vmem_cap = _vmem_capacity_bytes()
    budget = int(0.75 * vmem_cap)

    def vmem_estimate(tn):
        row = tn * D_pad
        return (2 * tile_k * D_pad * w_itemsize   # K-streamed weight, double-buffered
                + 2 * row * x_itemsize            # x tiles (double-buffered)
                + 2 * row * x_itemsize            # out tiles (double-buffered)
                + row * w_itemsize                # normed scratch (MXU feed dtype)
                + row * 4                         # f32 accumulator scratch
                + 3 * row * 4                     # live f32 LayerNorm temporaries
                + 8 * D_pad * 4)                  # a_2 / b_2 / bias blocks

    tile_n = sub_mult
    for cand in (1024, 512, 256, 128, 64, 32, 16, 8):
        if cand % sub_mult == 0 and vmem_estimate(cand) <= budget:
            tile_n = cand
            break
    tile_n = max(sub_mult, min(tile_n, _round_up(N, sub_mult)))
    # Guarantee >= 2 row tiles when possible so the "parallel" grid axis spans
    # both v7x TensorCores (no effect on v5e / v6e).
    while (_round_up(N, tile_n) // tile_n) < 2 and tile_n // 2 >= sub_mult \
            and (tile_n // 2) % sub_mult == 0:
        tile_n //= 2

    est = vmem_estimate(tile_n)
    vmem_limit = int(min(vmem_cap, max(32 * 1024 * 1024, est + est // 2)))
    return tile_n, tile_k, vmem_limit


def sublayer_connection(x, params, *, approx_reciprocal=False):
    """x: (B, S, D). Returns x + Linear(LayerNorm(x)) with PyTorch semantics."""
    B, S, D = x.shape
    N = B * S
    assert D == params["d_valid"]
    D_pad = params["d_pad"]
    a2, b2, w2, wb2 = params["a2"], params["b2"], params["w2"], params["wb2"]

    x_itemsize = jnp.dtype(x.dtype).itemsize
    w_itemsize = jnp.dtype(w2.dtype).itemsize
    tile_n, tile_k, vmem_limit = _choose_tiles(N, D_pad, x_itemsize, w_itemsize)
    N_pad = _round_up(N, tile_n)

    x2d = x.reshape(N, D)
    padded = (D_pad != D) or (N_pad != N)
    if padded:
        # Slow path only for ragged shapes; lane-aligned shapes (D % 128 == 0 and
        # N % tile_n == 0) go straight through with zero extra HBM copies.
        x2d = jnp.zeros((N_pad, D_pad), x.dtype).at[:N, :D].set(x2d)

    kernel = functools.partial(_sublayer_kernel, d_valid=D, tile_k=tile_k,
                               approx_reciprocal=approx_reciprocal)

    cost = pl.CostEstimate(
        flops=2 * N * D * D + 10 * N * D,
        transcendentals=N,
        bytes_accessed=(2 * N * D * x_itemsize + D_pad * D_pad * w_itemsize
                        + 3 * D_pad * 4))

    out = pl.pallas_call(
        kernel,
        out_shape=jax.ShapeDtypeStruct((N_pad, D_pad), x.dtype),
        grid_spec=pltpu.PrefetchScalarGridSpec(
            num_scalar_prefetch=0,
            grid=(N_pad // tile_n, D_pad // tile_k),
            in_specs=[
                pl.BlockSpec((tile_n, D_pad), lambda i, k: (i, 0)),   # x (row tile)
                pl.BlockSpec((1, D_pad), lambda i, k: (0, 0)),        # a_2
                pl.BlockSpec((1, D_pad), lambda i, k: (0, 0)),        # b_2
                pl.BlockSpec((tile_k, D_pad), lambda i, k: (k, 0)),   # W (K-streamed)
                pl.BlockSpec((1, D_pad), lambda i, k: (0, 0)),        # bias
            ],
            out_specs=pl.BlockSpec((tile_n, D_pad), lambda i, k: (i, 0)),
            scratch_shapes=[pltpu.VMEM((tile_n, D_pad), w2.dtype),      # normed
                            pltpu.VMEM((tile_n, D_pad), jnp.float32)],  # f32 acc
        ),
        compiler_params=pltpu.CompilerParams(
            dimension_semantics=("parallel", "arbitrary"),
            vmem_limit_bytes=vmem_limit),
        cost_estimate=cost,
    )(x2d, a2, b2, w2, wb2)

    if padded:
        out = out[:N, :D]
    return out.reshape(B, S, D)


def reference(x, a_2, b_2, w, wb):
    xf = x.astype(jnp.float32)
    mean = jnp.mean(xf, axis=-1, keepdims=True)
    xc = xf - mean
    var = jnp.sum(xc * xc, axis=-1, keepdims=True) / (x.shape[-1] - 1)
    normed = a_2 * xc / (jnp.sqrt(var) + EPS) + b_2
    sub = jnp.dot(normed, w.astype(jnp.float32),
                  precision=lax.Precision.HIGHEST) + wb
    return (xf + sub).astype(x.dtype)


if __name__ == "__main__":
    key = jax.random.PRNGKey(0)
    kx, kw, kb = jax.random.split(key, 3)

    # Shapes implied by the module: batch=2, seq=8, hidden=32.
    B, S, D = 2, 8, 32
    x = jax.random.normal(kx, (B, S, D), dtype=jnp.float32)
    a_2 = jnp.ones((D,), jnp.float32)      # LayerNorm.a_2 (init: ones)
    b_2 = jnp.zeros((D,), jnp.float32)     # LayerNorm.b_2 (init: zeros)
    w = jax.random.normal(kw, (D, D), jnp.float32) / jnp.sqrt(D)   # sublayer Linear
    wb = jax.random.normal(kb, (D,), jnp.float32) * 0.01

    params = prepare_sublayer_params(a_2, b_2, w, wb)   # once, at init
    out = jax.block_until_ready(sublayer_connection(x, params))
    assert out.shape == (B, S, D)
    assert jnp.allclose(out, reference(x, a_2, b_2, w, wb), atol=2e-3, rtol=2e-3)

    # Lane-aligned fast path (D % 128 == 0: no pad / slice copies at all).
    D2 = 128
    x2 = jax.random.normal(kx, (B, S, D2), dtype=jnp.float32)
    a2v = jnp.ones((D2,), jnp.float32)
    b2v = jnp.zeros((D2,), jnp.float32)
    w2v = jax.random.normal(kw, (D2, D2), jnp.float32) / jnp.sqrt(D2)
    wb2v = jax.random.normal(kb, (D2,), jnp.float32) * 0.01

    p_f32 = prepare_sublayer_params(a2v, b2v, w2v, wb2v)
    out_f32 = jax.block_until_ready(sublayer_connection(x2, p_f32))
    assert jnp.allclose(out_f32, reference(x2, a2v, b2v, w2v, wb2v),
                        atol=2e-3, rtol=2e-3)

    # bf16 MXU feed: weight cast once at init; checked against bf16-weight reference.
    p_bf16 = prepare_sublayer_params(a2v, b2v, w2v, wb2v, mxu_dtype=jnp.bfloat16)
    out_bf16 = jax.block_until_ready(sublayer_connection(x2, p_bf16))
    ref_bf16 = reference(x2, a2v, b2v,
                         w2v.astype(jnp.bfloat16).astype(jnp.float32), wb2v)
    assert jnp.allclose(out_bf16, ref_bf16, atol=5e-2, rtol=5e-2)

    print("KERNEL_OK")
</pallas_src>

<mosaic_0001>
module attributes {stable_mosaic.version = 11 : i64} {
  func.func @_sublayer_kernel(%arg0: i32, %arg1: i32, %arg2: memref<8x128xf32, #tpu.memory_space<vmem>>, %arg3: memref<1x128xf32, #tpu.memory_space<vmem>>, %arg4: memref<1x128xf32, #tpu.memory_space<vmem>>, %arg5: memref<128x128xf32, #tpu.memory_space<vmem>>, %arg6: memref<1x128xf32, #tpu.memory_space<vmem>>, %arg7: memref<8x128xf32, #tpu.memory_space<vmem>>, %arg8: memref<8x128xf32, #tpu.memory_space<vmem>>, %arg9: memref<8x128xf32, #tpu.memory_space<vmem>>) attributes {dimension_semantics = [#tpu.dimension_semantics<parallel>, #tpu.dimension_semantics<arbitrary>], iteration_bounds = array<i64: 2, 1>, scalar_prefetch = 0 : i64, scratch_operands = 2 : i64, tpu.core_type = #tpu.core_type<tc>, window_params = [{transform_indices = @transform_0, window_bounds = array<i64: 8, 128>}, {pipeline_mode = #tpu.pipeline_mode<synchronous>, transform_indices = @transform_1, window_bounds = array<i64: 1, 128>}, {pipeline_mode = #tpu.pipeline_mode<synchronous>, transform_indices = @transform_2, window_bounds = array<i64: 1, 128>}, {transform_indices = @transform_3, window_bounds = array<i64: 128, 128>}, {pipeline_mode = #tpu.pipeline_mode<synchronous>, transform_indices = @transform_4, window_bounds = array<i64: 1, 128>}, {transform_indices = @transform_5, window_bounds = array<i64: 8, 128>}]} {
    %c0_i32 = arith.constant 0 : i32
    %0 = arith.cmpi eq, %arg1, %c0_i32 : i32
    %1 = arith.extui %0 : i1 to i32
    %c0_i32_0 = arith.constant 0 : i32
    %2 = arith.cmpi ne, %1, %c0_i32_0 : i32
    scf.if %2 {
      %c0_9 = arith.constant 0 : index
      %c0_10 = arith.constant 0 : index
      %15 = vector.load %arg2[%c0_9, %c0_10] : memref<8x128xf32, #tpu.memory_space<vmem>>, vector<8x128xf32>
      %16 = tpu.iota {dimensions = array<i32: 1>} : vector<1x128xi32>
      %c32_i32 = arith.constant 32 : i32
      %17 = vector.broadcast %c32_i32 : i32 to vector<1x128xi32>
      %18 = arith.cmpi slt, %16, %17 : vector<1x128xi32>
      %cst_11 = arith.constant dense<0.000000e+00> : vector<8xf32>
      %19 = vector.multi_reduction <add>, %15, %cst_11 [1] : vector<8x128xf32> to vector<8xf32>
      %20 = vector.shape_cast %19 : vector<8xf32> to vector<8x1xf32>
      %cst_12 = arith.constant 3.125000e-02 : f32
      %21 = vector.broadcast %cst_12 : f32 to vector<8x1xf32>
      %22 = arith.mulf %20, %21 : vector<8x1xf32>
      %23 = vector.broadcast %22 : vector<8x1xf32> to vector<8x128xf32>
      %24 = arith.subf %15, %23 : vector<8x128xf32>
      %cst_13 = arith.constant 0.000000e+00 : f32
      %25 = vector.shape_cast %18 : vector<1x128xi1> to vector<1x128xi1>
      %26 = vector.broadcast %25 : vector<1x128xi1> to vector<8x128xi1>
      %27 = vector.broadcast %cst_13 : f32 to vector<8x128xf32>
      %28 = arith.select %26, %24, %27 : vector<8x128xi1>, vector<8x128xf32>
      %29 = arith.mulf %28, %28 : vector<8x128xf32>
      %cst_14 = arith.constant dense<0.000000e+00> : vector<8xf32>
      %30 = vector.multi_reduction <add>, %29, %cst_14 [1] : vector<8x128xf32> to vector<8xf32>
      %31 = vector.shape_cast %30 : vector<8xf32> to vector<8x1xf32>
      %cst_15 = arith.constant 0.0322580636 : f32
      %32 = vector.broadcast %cst_15 : f32 to vector<8x1xf32>
      %33 = arith.mulf %31, %32 : vector<8x1xf32>
      %34 = math.sqrt %33 : vector<8x1xf32>
      %cst_16 = arith.constant 9.99999997E-7 : f32
      %35 = vector.broadcast %cst_16 : f32 to vector<8x1xf32>
      %36 = arith.addf %34, %35 : vector<8x1xf32>
      %cst_17 = arith.constant 1.000000e+00 : f32
      %37 = vector.broadcast %cst_17 : f32 to vector<8x1xf32>
      %38 = arith.divf %37, %36 : vector<8x1xf32>
      %c0_18 = arith.constant 0 : index
      %c0_19 = arith.constant 0 : index
      %39 = vector.load %arg3[%c0_18, %c0_19] : memref<1x128xf32, #tpu.memory_space<vmem>>, vector<1x128xf32>
      %40 = vector.broadcast %38 : vector<8x1xf32> to vector<8x128xf32>
      %41 = arith.mulf %28, %40 : vector<8x128xf32>
      %42 = vector.broadcast %39 : vector<1x128xf32> to vector<8x128xf32>
      %43 = arith.mulf %42, %41 : vector<8x128xf32>
      %c0_20 = arith.constant 0 : index
      %c0_21 = arith.constant 0 : index
      %44 = vector.load %arg4[%c0_20, %c0_21] : memref<1x128xf32, #tpu.memory_space<vmem>>, vector<1x128xf32>
      %45 = vector.broadcast %44 : vector<1x128xf32> to vector<8x128xf32>
      %46 = arith.addf %43, %45 : vector<8x128xf32>
      %c0_22 = arith.constant 0 : index
      %c0_23 = arith.constant 0 : index
      %47 = vector.load %arg8[%c0_22, %c0_23] : memref<8x128xf32, #tpu.memory_space<vmem>>, vector<8x128xf32>
      tpu.vector_store %arg8[%c0_22, %c0_23], %46 {strides = array<i32>} : memref<8x128xf32, #tpu.memory_space<vmem>>, vector<8x128xf32>,
      %cst_24 = arith.constant 0.000000e+00 : f32
      %48 = vector.broadcast %cst_24 : f32 to vector<8x128xf32>
      %c0_25 = arith.constant 0 : index
      %c0_26 = arith.constant 0 : index
      %49 = vector.load %arg9[%c0_25, %c0_26] : memref<8x128xf32, #tpu.memory_space<vmem>>, vector<8x128xf32>
      tpu.vector_store %arg9[%c0_25, %c0_26], %48 {strides = array<i32>} : memref<8x128xf32, #tpu.memory_space<vmem>>, vector<8x128xf32>,
    } else {
    }
    %c128_i32 = arith.constant 128 : i32
    %3 = arith.muli %arg1, %c128_i32 : i32
    %4 = tpu.assume_multiple %3, 128 : i32
    %c0 = arith.constant 0 : index
    %c0_1 = arith.constant 0 : index
    %5 = vector.load %arg9[%c0, %c0_1] : memref<8x128xf32, #tpu.memory_space<vmem>>, vector<8x128xf32>
    %c0_2 = arith.constant 0 : index
    %6 = arith.index_cast %4 : i32 to index
    %7 = vector.load %arg8[%c0_2, %6] : memref<8x128xf32, #tpu.memory_space<vmem>>, vector<8x128xf32>
    %c0_3 = arith.constant 0 : index
    %c0_4 = arith.constant 0 : index
    %8 = vector.load %arg5[%c0_3, %c0_4] : memref<128x128xf32, #tpu.memory_space<vmem>>, vector<128x128xf32>
    %cst = arith.constant dense<0.000000e+00> : vector<8x128xf32>
    %9 = tpu.matmul %7, %8, %cst {dimension_numbers = #tpu.dot_dimension_numbers<[1], [0], [0], [1], [0, 0, 1, 1], [], []>} : vector<8x128xf32>, vector<128x128xf32>, vector<8x128xf32> -> vector<8x128xf32>
    %10 = arith.addf %5, %9 : vector<8x128xf32>
    %c0_5 = arith.constant 0 : index
    %c0_6 = arith.constant 0 : index
    %11 = vector.load %arg9[%c0_5, %c0_6] : memref<8x128xf32, #tpu.memory_space<vmem>>, vector<8x128xf32>
    tpu.vector_store %arg9[%c0_5, %c0_6], %10 {strides = array<i32>} : memref<8x128xf32, #tpu.memory_space<vmem>>, vector<8x128xf32>,
    %c0_i32_7 = arith.constant 0 : i32
    %12 = arith.cmpi eq, %arg1, %c0_i32_7 : i32
    %13 = arith.extui %12 : i1 to i32
    %c0_i32_8 = arith.constant 0 : i32
    %14 = arith.cmpi ne, %13, %c0_i32_8 : i32
    scf.if %14 {
      %c0_9 = arith.constant 0 : index
      %c0_10 = arith.constant 0 : index
      %15 = vector.load %arg9[%c0_9, %c0_10] : memref<8x128xf32, #tpu.memory_space<vmem>>, vector<8x128xf32>
      %c0_11 = arith.constant 0 : index
      %c0_12 = arith.constant 0 : index
      %16 = vector.load %arg6[%c0_11, %c0_12] : memref<1x128xf32, #tpu.memory_space<vmem>>, vector<1x128xf32>
      %17 = vector.broadcast %16 : vector<1x128xf32> to vector<8x128xf32>
      %18 = arith.addf %15, %17 : vector<8x128xf32>
      %c0_13 = arith.constant 0 : index
      %c0_14 = arith.constant 0 : index
      %19 = vector.load %arg2[%c0_13, %c0_14] : memref<8x128xf32, #tpu.memory_space<vmem>>, vector<8x128xf32>
      %20 = arith.addf %19, %18 : vector<8x128xf32>
      %c0_15 = arith.constant 0 : index
      %c0_16 = arith.constant 0 : index
      %21 = vector.load %arg7[%c0_15, %c0_16] : memref<8x128xf32, #tpu.memory_space<vmem>>, vector<8x128xf32>
      tpu.vector_store %arg7[%c0_15, %c0_16], %20 {strides = array<i32>} : memref<8x128xf32, #tpu.memory_space<vmem>>, vector<8x128xf32>,
    } else {
    }
    return
  }
  func.func @transform_0(%arg0: i32, %arg1: i32) -> (i32, i32) {
    %c0_i32 = arith.constant 0 : i32
    %c0_i32_0 = arith.constant 0 : i32
    return %arg0, %c0_i32 : i32, i32
  }
  func.func @transform_1(%arg0: i32, %arg1: i32) -> (i32, i32) {
    %c0_i32 = arith.constant 0 : i32
    %c0_i32_0 = arith.constant 0 : i32
    %c0_i32_1 = arith.constant 0 : i32
    return %c0_i32, %c0_i32_0 : i32, i32
  }
  func.func @transform_2(%arg0: i32, %arg1: i32) -> (i32, i32) {
    %c0_i32 = arith.constant 0 : i32
    %c0_i32_0 = arith.constant 0 : i32
    %c0_i32_1 = arith.constant 0 : i32
    return %c0_i32, %c0_i32_0 : i32, i32
  }
  func.func @transform_3(%arg0: i32, %arg1: i32) -> (i32, i32) {
    %c0_i32 = arith.constant 0 : i32
    %c0_i32_0 = arith.constant 0 : i32
    return %arg1, %c0_i32 : i32, i32
  }
  func.func @transform_4(%arg0: i32, %arg1: i32) -> (i32, i32) {
    %c0_i32 = arith.constant 0 : i32
    %c0_i32_0 = arith.constant 0 : i32
    %c0_i32_1 = arith.constant 0 : i32
    return %c0_i32, %c0_i32_0 : i32, i32
  }
  func.func @transform_5(%arg0: i32, %arg1: i32) -> (i32, i32) {
    %c0_i32 = arith.constant 0 : i32
    %c0_i32_0 = arith.constant 0 : i32
    return %arg0, %c0_i32 : i32, i32
  }
}

</mosaic_0001>

<llo_original>
// kernel: tpu_custom_call.1
$region0: #{tpu_custom_call.1}
  #allocation0 [shape = 'u32[]', space=smem, size = 0x4, offset = 0x4, fixed_abs, tag = 'smem constant byte address 0x4 - core index']
  #allocation1 [shape = 'u32[72,128]{1,0:T(1,128)}', space=vmem, size = 0x9000, scoped, tag = 'internal scratch']
  #allocation2 [shape = 'f32[8,128]{1,0:T(8,128)}', space=vmem, size = 0x1000, scoped, tag = 'scratch operand']
  #allocation3 [shape = 'f32[8,128]{1,0:T(8,128)}', space=vmem, size = 0x1000, scoped, tag = 'scratch operand']
  %s0 = inlined_call_operand.hbm [shape: f32[16,128], index: 0, kind: input, shape index: {}]
  %s1 = inlined_call_operand.hbm [shape: f32[1,128], index: 1, kind: input, shape index: {}]
  %s2 = inlined_call_operand.vmem [shape: f32[1,128], index: 2, kind: input, shape index: {}]
  %s3 = inlined_call_operand.hbm [shape: f32[128,128], index: 3, kind: input, shape index: {}]
  %s4 = inlined_call_operand.vmem [shape: f32[1,128], index: 4, kind: input, shape index: {}]
  %s5 = inlined_call_operand.hbm [shape: f32[16,128], index: 5, kind: output, shape index: {}]
  %s6 = sld [smem:[#allocation0]]
  $region73: #{tpu_custom_call.1} parent=0
    _
  %s8 = ssub.s32 1, %s6
  %s9 = scalar_select 0, %s8, %s6
  $region1: #{tpu_custom_call.1} parent=0
    #allocation4 [shape = 'u8[8192]{0}', space=vmem, size = 0x2000, scoped, tag = 'input window, operand 0']
    #allocation5 [shape = 's32[2]{0}', space=sflag, size = 0x8, scoped, tag = 'scoped memory for tpu_custom_call.1']
    #allocation6 [shape = 's32[2]{0}', space=sflag, size = 0x8, scoped, tag = 'scoped memory for tpu_custom_call.1']
    #allocation7 [shape = 'u8[512]{0}', space=vmem, size = 0x400, scoped, tag = 'input window, operand 1, single buffered']
    #allocation8 [shape = 's32[1]{0}', space=sflag, size = 0x4, scoped, tag = 'scoped memory for tpu_custom_call.1']
    #allocation9 [shape = 'u8[65536]{0}', space=vmem, size = 0x10000, scoped, tag = 'input window, operand 3, single buffered']
    #allocation10 [shape = 'u8[8192]{0}', space=vmem, size = 0x2000, scoped, tag = 'output window, operand 0']
    %10 = vsyncpa [#allocation5], 0
    %s11 = scalar_lea.sflag [#allocation5], 1
    %12 = vsyncpa %s11, 0
    %13 = vsyncpa [#allocation8], 0
    %14 = vsyncpa [#allocation6], 0
    %s15 = scalar_lea.sflag [#allocation6], 1
    %16 = vsyncpa %s15, 0
    loop: start=0, step=1, limit=4
    $region2: #{tpu_custom_call.1} parent=1 // loop_pre_header
      _
    $region3: #{tpu_custom_call.1} parent=1 // loop_header
      %s18 = sphi 0, %s22
      %p19 = scmp.ge.s32.totalorder %s18, 4
      %s25 = sphi 0, %s37
      %s26 = sphi 0, %s33
      %s27 = sphi 0, %s25
      %s28 = sphi 0, %s26
      %s29 = sphi 0, %s27
      %s30 = sphi 0, %s28
      %s40 = sphi 0, %s42
      %s43 = sphi 0, %s40
      %s44 = sphi 0, %s43
      %s60 = sphi 0, %s44
      %s64 = sphi 0, %s64
      %s66 = sphi 0, %s64
      %s67 = sphi 0, %s66
      %s81 = sphi 0, %s67
      %s85 = sphi 0, %s85
      %s87 = sphi 0, %s85
      %s88 = sphi 0, %s87
      %s102 = sphi 0, %s88
      %s108 = sphi 0, %s110
      %s111 = sphi 0, %s108
      %s112 = sphi 0, %s111
      %s128 = sphi 0, %s112
      %s132 = sphi 0, %s132
      %s134 = sphi 0, %s132
      %s135 = sphi 0, %s134
      %s149 = sphi 0, %s135
      %s155 = sphi 0, %s157
      %s158 = sphi 0, %s155
      %s159 = sphi 0, %s158
      %s175 = sphi 0, %s159
    $region4: #{tpu_custom_call.1} parent=1 // loop_header_branch
      %21 = sbr.rel (%p19) target = $region8
    $region5: #{tpu_custom_call.1} parent=1 // loop_body
      %s23 = ssub.s32 %s18, 1
      %s24 = ssub.s32 %s18, 2
      %s31 = sadd.s32 1, %s26
      %p32 = scmp.ge.s32.totalorder %s31, 1
      %s33 = scalar_select %p32, 0, %s31
      %s34 = sadd.s32 1, %s25
      %s35 = scalar_select %p32, %s34, %s25
      %p36 = scmp.ge.s32.totalorder %s35, 2
      %s37 = scalar_select %p36, 0, %s35
      %s38 = ssub.s32 %s25, %s37
      %p39 = scmp.eq.s32.totalorder %s38, 0
      %s41 = sadd.s32 %s40, 1
      %s42 = scalar_select %p39, %s40, %s41
      %p45 = pneg %p39
      %p46 = scmp.eq.s32.totalorder %s18, 1
      %p47 = por %p45, %p46
      %p48 = scmp.ne.s32.totalorder %s40, %s43
      %p49 = scmp.eq.s32.totalorder %s18, 0
      %p50 = por %p48, %p49
      %p51 = scmp.ne.s32.totalorder %s40, %s43
      %p52 = scmp.eq.s32.totalorder %s23, 1
      %p53 = por %p51, %p52
      %p54 = scmp.ne.s32.totalorder %s43, %s44
      %p55 = scmp.eq.s32.totalorder %s23, 0
      %p56 = por %p54, %p55
      %p57 = scmp.ne.s32.totalorder %s43, %s44
      %p58 = scmp.eq.s32.totalorder %s24, 1
      %p59 = por %p57, %p58
      %p61 = scmp.ne.s32.totalorder %s44, %s60
      %p62 = scmp.eq.s32.totalorder %s24, 0
      %p63 = por %p61, %p62
      %s65 = sadd.s32 %s64, 1
      %p68 = scmp.eq.s32.totalorder %s18, 1
      %p69 = scmp.ne.s32.totalorder %s64, %s66
      %p70 = scmp.eq.s32.totalorder %s18, 0
      %p71 = por %p69, %p70
      %p72 = scmp.ne.s32.totalorder %s64, %s66
      %p73 = scmp.eq.s32.totalorder %s23, 1
      %p74 = por %p72, %p73
      %p75 = scmp.ne.s32.totalorder %s66, %s67
      %p76 = scmp.eq.s32.totalorder %s23, 0
      %p77 = por %p75, %p76
      %p78 = scmp.ne.s32.totalorder %s66, %s67
      %p79 = scmp.eq.s32.totalorder %s24, 1
      %p80 = por %p78, %p79
      %p82 = scmp.ne.s32.totalorder %s67, %s81
      %p83 = scmp.eq.s32.totalorder %s24, 0
      %p84 = por %p82, %p83
      %s86 = sadd.s32 %s85, 1
      %p89 = scmp.eq.s32.totalorder %s18, 1
      %p90 = scmp.ne.s32.totalorder %s85, %s87
      %p91 = scmp.eq.s32.totalorder %s18, 0
      %p92 = por %p90, %p91
      %p93 = scmp.ne.s32.totalorder %s85, %s87
      %p94 = scmp.eq.s32.totalorder %s23, 1
      %p95 = por %p93, %p94
      %p96 = scmp.ne.s32.totalorder %s87, %s88
      %p97 = scmp.eq.s32.totalorder %s23, 0
      %p98 = por %p96, %p97
      %p99 = scmp.ne.s32.totalorder %s87, %s88
      %p100 = scmp.eq.s32.totalorder %s24, 1
      %p101 = por %p99, %p100
      %p103 = scmp.ne.s32.totalorder %s88, %s102
      %p104 = scmp.eq.s32.totalorder %s24, 0
      %p105 = por %p103, %p104
      %s106 = ssub.s32 %s26, %s33
      %p107 = scmp.eq.s32.totalorder %s106, 0
      %s109 = sadd.s32 %s108, 1
      %s110 = scalar_select %p107, %s108, %s109
      %p113 = pneg %p107
      %p114 = scmp.eq.s32.totalorder %s18, 1
      %p115 = por %p113, %p114
      %p116 = scmp.ne.s32.totalorder %s108, %s111
      %p117 = scmp.eq.s32.totalorder %s18, 0
      %p118 = por %p116, %p117
      %p119 = scmp.ne.s32.totalorder %s108, %s111
      %p120 = scmp.eq.s32.totalorder %s23, 1
      %p121 = por %p119, %p120
      %p122 = scmp.ne.s32.totalorder %s111, %s112
      %p123 = scmp.eq.s32.totalorder %s23, 0
      %p124 = por %p122, %p123
      %p125 = scmp.ne.s32.totalorder %s111, %s112
      %p126 = scmp.eq.s32.totalorder %s24, 1
      %p127 = por %p125, %p126
      %p129 = scmp.ne.s32.totalorder %s112, %s128
      %p130 = scmp.eq.s32.totalorder %s24, 0
      %p131 = por %p129, %p130
      %s133 = sadd.s32 %s132, 1
      %p136 = scmp.eq.s32.totalorder %s18, 1
      %p137 = scmp.ne.s32.totalorder %s132, %s134
      %p138 = scmp.eq.s32.totalorder %s18, 0
      %p139 = por %p137, %p138
      %p140 = scmp.ne.s32.totalorder %s132, %s134
      %p141 = scmp.eq.s32.totalorder %s23, 1
      %p142 = por %p140, %p141
      %p143 = scmp.ne.s32.totalorder %s134, %s135
      %p144 = scmp.eq.s32.totalorder %s23, 0
      %p145 = por %p143, %p144
      %p146 = scmp.ne.s32.totalorder %s134, %s135
      %p147 = scmp.eq.s32.totalorder %s24, 1
      %p148 = por %p146, %p147
      %p150 = scmp.ne.s32.totalorder %s135, %s149
      %p151 = scmp.eq.s32.totalorder %s24, 0
      %p152 = por %p150, %p151
      %s153 = ssub.s32 %s25, %s37
      %p154 = scmp.eq.s32.totalorder %s153, 0
      %s156 = sadd.s32 %s155, 1
      %s157 = scalar_select %p154, %s155, %s156
      %p160 = pneg %p154
      %p161 = scmp.eq.s32.totalorder %s18, 1
      %p162 = por %p160, %p161
      %p163 = scmp.ne.s32.totalorder %s155, %s158
      %p164 = scmp.eq.s32.totalorder %s18, 0
      %p165 = por %p163, %p164
      %p166 = scmp.ne.s32.totalorder %s155, %s158
      %p167 = scmp.eq.s32.totalorder %s23, 1
      %p168 = por %p166, %p167
      %p169 = scmp.ne.s32.totalorder %s158, %s159
      %p170 = scmp.eq.s32.totalorder %s23, 0
      %p171 = por %p169, %p170
      %p172 = scmp.ne.s32.totalorder %s158, %s159
      %p173 = scmp.eq.s32.totalorder %s24, 1
      %p174 = por %p172, %p173
      %p176 = scmp.ne.s32.totalorder %s159, %s175
      %p177 = scmp.eq.s32.totalorder %s24, 0
      %p178 = por %p176, %p177
      %p179 = scmp.le.s32.totalorder 1, %s18
      %p180 = scmp.lt.s32.totalorder %s18, 3
      %p181 = pnand %p179, %p180
      %p182 = pneg %p181
      // Predicated region
      $region9: #{tpu_custom_call.1} parent=5 // pred_check
        _
      $region10: #{tpu_custom_call.1} parent=5 // pred_check_branch
        %184 = sbr.rel (%p181) target = $region12
      $region11: #{tpu_custom_call.1} parent=5 // pred_region
        %s185 = ssub.s32 %s18, 1
        // Predicated region
        $region13: #{tpu_custom_call.1} parent=11 // pred_check
          %p186 = pneg %p77
        $region14: #{tpu_custom_call.1} parent=11 // pred_check_branch
          %188 = sbr.rel (%p186) target = $region16
        $region15: #{tpu_custom_call.1} parent=11 // pred_region
          %190 = vsyncadd [#allocation8], 0
          %s192 = sshll.u32 %s1, 4
          %s193 = int_to_ptr.hbm [resolvable:$true] %s192
          %s194 = sshll.u32 [#allocation7], 4
          %s195 = int_to_ptr.vmem [resolvable:$true] %s194
          %197 = dma.hbm_to_vmem [thread:$0]  %s193, 16, %s195, [#allocation8]
        $region16: #{tpu_custom_call.1} parent=11 // pred_fallthru
          _
        // Predicated region
        $region17: #{tpu_custom_call.1} parent=11 // pred_check
          %p198 = pneg %p98
        $region18: #{tpu_custom_call.1} parent=11 // pred_check_branch
          %200 = sbr.rel (%p198) target = $region20
        $region19: #{tpu_custom_call.1} parent=11 // pred_region
          _
        $region20: #{tpu_custom_call.1} parent=11 // pred_fallthru
          _
        // Predicated region
        $region21: #{tpu_custom_call.1} parent=11 // pred_check
          %p201 = pneg %p124
        $region22: #{tpu_custom_call.1} parent=11 // pred_check_branch
          %203 = sbr.rel (%p201) target = $region24
        $region23: #{tpu_custom_call.1} parent=11 // pred_region
          %s204 = smul.u32 16, %s28
          %206 = vsyncadd [#allocation8], 0
          %s207 = smul.addr %s204, 8
          %s208 = scalar_lea.hbm %s3, %s207
          %s209 = sshll.u32 %s208, 4
          %s210 = int_to_ptr.hbm [resolvable:$true] %s209
          %s211 = sshll.u32 [#allocation9], 4
          %s212 = int_to_ptr.vmem [resolvable:$true] %s211
          %217 = dma.hbm_to_vmem [thread:$0]  %s210, 2048, %s212, [#allocation8], 128, 128, 8
        $region24: #{tpu_custom_call.1} parent=11 // pred_fallthru
          _
        // Predicated region
        $region25: #{tpu_custom_call.1} parent=11 // pred_check
          %p218 = pneg %p145
        $region26: #{tpu_custom_call.1} parent=11 // pred_check_branch
          %220 = sbr.rel (%p218) target = $region28
        $region27: #{tpu_custom_call.1} parent=11 // pred_region
          _
        $region28: #{tpu_custom_call.1} parent=11 // pred_fallthru
          _
      $region12: #{tpu_custom_call.1} parent=5 // pred_fallthru
        _
      %p221 = scmp.lt.s32.totalorder %s18, 2
      // Predicated region
      $region29: #{tpu_custom_call.1} parent=5 // pred_check
        %p222 = pneg %p221
      $region30: #{tpu_custom_call.1} parent=5 // pred_check_branch
        %224 = sbr.rel (%p222) target = $region32
      $region31: #{tpu_custom_call.1} parent=5 // pred_region
        // Predicated region
        $region33: #{tpu_custom_call.1} parent=31 // pred_check
          %p225 = pneg %p50
        $region34: #{tpu_custom_call.1} parent=31 // pred_check_branch
          %227 = sbr.rel (%p225) target = $region36
        $region35: #{tpu_custom_call.1} parent=31 // pred_region
          %s228 = sand.u32 %s40, 1
          %s229 = scalar_lea.sflag [#allocation5], %s228
          %s230 = sand.u32 %s40, 1
          %s231 = smul.addr %s230, 8
          %s232 = scalar_lea.vmem [#allocation4], %s231
          %234 = vsyncadd %s229, 0
          %s235 = smul.addr %s25, 8
          %s236 = scalar_lea.hbm %s0, %s235
          %s238 = sshll.u32 %s236, 4
          %s239 = int_to_ptr.hbm [resolvable:$true] %s238
          %s240 = sshll.u32 %s232, 4
          %s241 = int_to_ptr.vmem [resolvable:$true] %s240
          %243 = dma.hbm_to_vmem [thread:$0]  %s239, 128, %s241, %s229
        $region36: #{tpu_custom_call.1} parent=31 // pred_fallthru
          _
      $region32: #{tpu_custom_call.1} parent=5 // pred_fallthru
        _
      %p244 = scmp.le.s32.totalorder 1, %s18
      %p245 = scmp.lt.s32.totalorder %s18, 3
      %p246 = pnand %p244, %p245
      %p247 = pneg %p246
      // Predicated region
      $region37: #{tpu_custom_call.1} parent=5 // pred_check
        _
      $region38: #{tpu_custom_call.1} parent=5 // pred_check_branch
        %249 = sbr.rel (%p246) target = $region40
      $region39: #{tpu_custom_call.1} parent=5 // pred_region
        %s250 = ssub.s32 %s18, 1
        %s251 = sand.u32 %s43, 1
        %s252 = scalar_lea.sflag [#allocation5], %s251
        %s253 = sand.u32 %s43, 1
        %s254 = smul.addr %s253, 8
        %s255 = scalar_lea.vmem [#allocation4], %s254
        // Predicated region
        $region41: #{tpu_custom_call.1} parent=39 // pred_check
          %p256 = pneg %p56
        $region42: #{tpu_custom_call.1} parent=39 // pred_check_branch
          %258 = sbr.rel (%p256) target = $region44
        $region43: #{tpu_custom_call.1} parent=39 // pred_region
          %260 = dma.done %s252, 128
        $region44: #{tpu_custom_call.1} parent=39 // pred_fallthru
          _
        // Predicated region
        $region45: #{tpu_custom_call.1} parent=39 // pred_check
          %p261 = pneg %p77
        $region46: #{tpu_custom_call.1} parent=39 // pred_check_branch
          %263 = sbr.rel (%p261) target = $region48
        $region47: #{tpu_custom_call.1} parent=39 // pred_region
          %265 = dma.done [#allocation8], 16
        $region48: #{tpu_custom_call.1} parent=39 // pred_fallthru
          _
        // Predicated region
        $region49: #{tpu_custom_call.1} parent=39 // pred_check
          %p266 = pneg %p124
        $region50: #{tpu_custom_call.1} parent=39 // pred_check_branch
          %268 = sbr.rel (%p266) target = $region52
        $region51: #{tpu_custom_call.1} parent=39 // pred_region
          %270 = dma.done [#allocation8], 2048
        $region52: #{tpu_custom_call.1} parent=39 // pred_fallthru
          _
        %s271 = sand.u32 %s43, 1
        %s272 = scalar_lea.sflag [#allocation5], %s271
        %s273 = sand.u32 %s43, 1
        %s274 = smul.addr %s273, 8
        %s275 = scalar_lea.vmem [#allocation4], %s274
        %p276 = pneg %p56
        %p277 = pneg %p53
        %p278 = pneg %p77
        %p279 = pneg %p74
        %p280 = pneg %p98
        %p281 = pneg %p95
        %p282 = pneg %p124
        %p283 = pneg %p121
        %p284 = pneg %p145
        %p285 = pneg %p142
        %p286 = pneg %p171
        %p287 = pneg %p168
        %s288 = sand.u32 %s158, 1
        %s289 = scalar_lea.sflag [#allocation6], %s288
        %s290 = sand.u32 %s158, 1
        %s291 = smul.addr %s290, 8
        %s292 = scalar_lea.vmem [#allocation10], %s291
        %s293 = smul.u32 16, %s28
        %p294 = scmp.eq.s32.totalorder %s28, 0
        // Predicated region
        $region53: #{tpu_custom_call.1} parent=39 // pred_check
          %p295 = pneg %p294
        $region54: #{tpu_custom_call.1} parent=39 // pred_check_branch
          %297 = sbr.rel (%p295) target = $region56
        $region55: #{tpu_custom_call.1} parent=39 // pred_region
          %v298 = vld [vmem:[%s255] sm:$0xff]
          %v299 = vlaneseq
          %v300 = vand.u32 %v299, 127
          %vm301 = vcmp.lt.s32.totalorder %v300, 32
          %302 = vadd.xlane.f32.xlu0 %v298
          %v303 = vpop.xlane.xlu0 %302
          %v304 = vmul.f32 %v303, 0.03125
          %v305 = vsub.f32 %v298, %v304
          %v306 = vsel %vm301, 1, 0
          %vm307 = vcmp.eq.s32.totalorder %v306, 1
          %v308 = vsel %vm307, %v305, 0.0
          %v309 = vmul.f32 %v308, %v308
          %310 = vadd.xlane.f32.xlu0 %v309
          %v311 = vpop.xlane.xlu0 %310
          %v312 = vmul.f32 %v311, 0.032258064
          %v313 = vrsqrt.pop %v312
          %v314 = vmul.f32 %v313, %v312
          %v315 = vmul.f32 %v314, %v313
          %v316 = vmul.f32 0.5, %v315
          %v317 = vsub.f32 1.5, %v316
          %v318 = vmul.f32 %v313, %v317
          %v319 = vmul.f32 %v312, %v318
          %vm320 = vcmp.eq.f32.partialorder %v312, inf
          %v321 = vsel %vm320, %v312, %v319
          %vm322 = vcmp.eq.f32.partialorder %v312, 0.0
          %v323 = vand.u32 %v312, 2147483648
          %v324 = vsel %vm322, %v323, %v321
          %v325 = vadd.f32 %v324, 1e-06
          %v326 = vrcp.pop %v325
          %v327 = vmul.f32 %v325, %v326
          %v328 = vsub.f32 1.0, %v327
          %v329 = vmul.f32 %v326, %v328
          %v330 = vadd.f32 %v326, %v329
          %vm331 = vweird.f32 %v325
          %vm332 = vweird.f32 %v326
          %vm333 = vmor %vm331, %vm332
          %v334 = vsel %vm333, %v326, %v330
          %v335 = vand.u32 2147483647, %v325
          %vm336 = vcmp.eq.f32.partialorder %v335, 8.507059e+37
          %v337 = vand.u32 %v325, 2147483648
          %v338 = vor.u32 1.1754944e-38, %v337
          %v339 = vsel %vm336, %v338, %v334
          %v340 = vmul.f32 1.0, %v339
          %v341 = vld [vmem:[#allocation7] sm:$0x1]
          %v342 = vmul.f32 %v308, %v340
          %v344 = vperm.slane %v341, 0
          %v346 = vmul.f32 %v344, %v342
          %v347 = vld [vmem:[%s2] sm:$0x1]
          %v349 = vperm.slane %v347, 0
          %v351 = vadd.f32 %v346, %v349
          %352 = vst [vmem:[#allocation2] sm:$0xff] %v351
          %353 = vst [vmem:[#allocation3] sm:$0xff] 0.0
        $region56: #{tpu_custom_call.1} parent=39 // pred_fallthru
          _
        %s354 = smul.u32 %s28, 128
        %v355 = vld [vmem:[#allocation3] sm:$0xff]
        %s356 = sshra.s32 %s354, 7
        %s357 = sand.u32 %s354, 127
        %s358 = scalar_lea.vmem [#allocation2], %s356
        %v359 = vld [vmem:[%s358] sm:$0xff]
        %v360 = vld [vmem:[#allocation9] sm:$0xff]
        %v361 = vld [vmem:[#allocation9 + $0x8] sm:$0xff]
        %v362 = vld [vmem:[#allocation9 + $0x10] sm:$0xff]
        %v363 = vld [vmem:[#allocation9 + $0x18] sm:$0xff]
        %v364 = vld [vmem:[#allocation9 + $0x20] sm:$0xff]
        %v365 = vld [vmem:[#allocation9 + $0x28] sm:$0xff]
        %v366 = vld [vmem:[#allocation9 + $0x30] sm:$0xff]
        %v367 = vld [vmem:[#allocation9 + $0x38] sm:$0xff]
        %v368 = vld [vmem:[#allocation9 + $0x40] sm:$0xff]
        %v369 = vld [vmem:[#allocation9 + $0x48] sm:$0xff]
        %v370 = vld [vmem:[#allocation9 + $0x50] sm:$0xff]
        %v371 = vld [vmem:[#allocation9 + $0x58] sm:$0xff]
        %v372 = vld [vmem:[#allocation9 + $0x60] sm:$0xff]
        %v373 = vld [vmem:[#allocation9 + $0x68] sm:$0xff]
        %v374 = vld [vmem:[#allocation9 + $0x70] sm:$0xff]
        %v375 = vld [vmem:[#allocation9 + $0x78] sm:$0xff]
        %376 = vmatpush.msra.mxu0 %v375
        %377 = vmatpush.msra.mxu0 %v374
        %378 = vmatpush.msra.mxu0 %v373
        %379 = vmatpush.msra.mxu0 %v372
        %380 = vmatpush.msra.mxu0 %v371
        %381 = vmatpush.msra.mxu0 %v370
        %382 = vmatpush.msra.mxu0 %v369
        %383 = vmatpush.msra.mxu0 %v368
        %384 = vmatpush.msra.mxu0 %v367
        %385 = vmatpush.msra.mxu0 %v366
        %386 = vmatpush.msra.mxu0 %v365
        %387 = vmatpush.msra.mxu0 %v364
        %388 = vmatpush.msra.mxu0 %v363
        %389 = vmatpush.msra.mxu0 %v362
        %390 = vmatpush.msra.mxu0 %v361
        %391 = vmatpush.msra.mxu0 %v360
        %392 = vmatmul.f32.gmra.mxu0 %v359
        %v393 = vpop.f32.mrf.mxu0
        %v394 = vadd.f32 0.0, %v393
        %395 = vdwg.mxu0
        %v396 = vadd.f32 %v355, %v394
        %397 = vst [vmem:[#allocation3] sm:$0xff] %v396
        // Predicated region
        $region57: #{tpu_custom_call.1} parent=39 // pred_check
          %p398 = pneg %p294
        $region58: #{tpu_custom_call.1} parent=39 // pred_check_branch
          %400 = sbr.rel (%p398) target = $region60
        $region59: #{tpu_custom_call.1} parent=39 // pred_region
          %v401 = vld [vmem:[#allocation3] sm:$0xff]
          %v402 = vld [vmem:[%s4] sm:$0x1]
          %v404 = vperm.slane %v402, 0
          %v406 = vadd.f32 %v401, %v404
          %v407 = vld [vmem:[%s255] sm:$0xff]
          %v408 = vadd.f32 %v407, %v406
          %409 = vst [vmem:[%s292] sm:$0xff] %v408
        $region60: #{tpu_custom_call.1} parent=39 // pred_fallthru
          _
        %s410 = sand.u32 %s158, 1
        %s411 = scalar_lea.sflag [#allocation6], %s410
        %s412 = sand.u32 %s158, 1
        %s413 = smul.addr %s412, 8
        %s414 = scalar_lea.vmem [#allocation10], %s413
        // Predicated region
        $region61: #{tpu_custom_call.1} parent=39 // pred_check
          %p415 = pneg %p168
        $region62: #{tpu_custom_call.1} parent=39 // pred_check_branch
          %417 = sbr.rel (%p415) target = $region64
        $region63: #{tpu_custom_call.1} parent=39 // pred_region
          %419 = vsyncadd %s411, 0
          %s420 = smul.addr %s27, 8
          %s421 = scalar_lea.hbm %s5, %s420
          %s423 = sshll.u32 %s414, 4
          %s424 = int_to_ptr.vmem [resolvable:$true] %s423
          %s425 = sshll.u32 %s421, 4
          %s426 = int_to_ptr.hbm [resolvable:$true] %s425
          %428 = dma.vmem_to_hbm [thread:$0]  %s424, 128, %s426, %s411
        $region64: #{tpu_custom_call.1} parent=39 // pred_fallthru
          _
      $region40: #{tpu_custom_call.1} parent=5 // pred_fallthru
        _
      %p429 = scmp.le.s32.totalorder 2, %s18
      // Predicated region
      $region65: #{tpu_custom_call.1} parent=5 // pred_check
        %p430 = pneg %p429
      $region66: #{tpu_custom_call.1} parent=5 // pred_check_branch
        %432 = sbr.rel (%p430) target = $region68
      $region67: #{tpu_custom_call.1} parent=5 // pred_region
        %s433 = ssub.s32 %s18, 2
        // Predicated region
        $region69: #{tpu_custom_call.1} parent=67 // pred_check
          %p434 = pneg %p174
        $region70: #{tpu_custom_call.1} parent=67 // pred_check_branch
          %436 = sbr.rel (%p434) target = $region72
        $region71: #{tpu_custom_call.1} parent=67 // pred_region
          %s437 = sand.u32 %s159, 1
          %s438 = scalar_lea.sflag [#allocation6], %s437
          %s439 = sand.u32 %s159, 1
          %s440 = smul.addr %s439, 8
          %s441 = scalar_lea.vmem [#allocation10], %s440
          %443 = dma.done %s438, 128
        $region72: #{tpu_custom_call.1} parent=67 // pred_fallthru
          _
      $region68: #{tpu_custom_call.1} parent=5 // pred_fallthru
        _
    $region6: #{tpu_custom_call.1} parent=1 // loop_footer
      %s22 = sadd.s32 1, %s18
    $region7: #{tpu_custom_call.1} parent=1 // loop_footer_branch
      %17 = sbr.rel target = $region3
    $region8: #{tpu_custom_call.1} parent=1 // loop_exit
      _
    %444 = vsyncpa [#allocation5], 1
    %s445 = scalar_lea.sflag [#allocation5], 1
    %446 = vsyncpa %s445, 1
    %447 = vsyncpa [#allocation8], 1
    %448 = vsyncpa [#allocation6], 1
    %s449 = scalar_lea.sflag [#allocation6], 1
    %450 = vsyncpa %s449, 1

</llo_original>
